<compile_context>
chip_gen: v7x
topology: tpu7x:2x2x1
jax: 0.10.0
libtpu: 0.0.40
codegen_flags: <defaults>
</compile_context>

<pallas_src>
import functools

import jax
import jax.numpy as jnp
from jax.experimental import pallas as pl
from jax.experimental.pallas import tpu as pltpu

D_IN, D_H1, D_H2, D_OUT = 3, 512, 256, 192


def _round_up(a, b):
    return (a + b - 1) // b * b


def _sigmoid(z):
    # 1 / (1 + exp(-z)); exp and the approximate reciprocal both go to the EUP.
    return pl.reciprocal(1.0 + jnp.exp(-z), approx=True)


def _mlp_kernel(x_ref, w1_ref, b1_ref, w2_ref, b2_ref, w3_ref, b3_ref, o_ref):
    # fc1: Linear(3, 512) + ReLU   (bf16 MXU matmul, f32 accumulate, VPU max)
    x = x_ref[...].astype(jnp.bfloat16)
    h1 = jnp.dot(x, w1_ref[...], preferred_element_type=jnp.float32)
    h1 = jnp.maximum(h1 + b1_ref[...], 0.0)

    # fc2: Linear(512, 256) + Sigmoid
    h2 = jnp.dot(h1.astype(jnp.bfloat16), w2_ref[...],
                 preferred_element_type=jnp.float32)
    h2 = _sigmoid(h2 + b2_ref[...])

    # fc3: Linear(256, 192) + Sigmoid  (true 192-wide, lane-aligned + 64 masked)
    h3 = jnp.dot(h2.astype(jnp.bfloat16), w3_ref[...],
                 preferred_element_type=jnp.float32)
    h3 = _sigmoid(h3 + b3_ref[...])

    o_ref[...] = h3.astype(o_ref.dtype)


def prepare_params(params):
    """One-time param prep (hoisted out of the forward): bf16 weights stored
    [in, out], f32 biases stored [1, out]."""
    return dict(
        w1=jnp.asarray(params["w1"], jnp.bfloat16),
        w2=jnp.asarray(params["w2"], jnp.bfloat16),
        w3=jnp.asarray(params["w3"], jnp.bfloat16),
        b1=jnp.asarray(params["b1"], jnp.float32).reshape(1, D_H1),
        b2=jnp.asarray(params["b2"], jnp.float32).reshape(1, D_H2),
        b3=jnp.asarray(params["b3"], jnp.float32).reshape(1, D_OUT),
    )


def _choose_tile_m(n, tile_m_max):
    # bf16 output packs 16 rows per sublane group -> keep tile_m % 16 == 0.
    if n <= 32:
        return _round_up(max(n, 16), 16)
    # Aim for >= 2 grid steps so v7x's two TensorCores can split the
    # "parallel" batch axis; cap by tile_m_max for VMEM budgeting.
    tile = min(tile_m_max, _round_up(pl.cdiv(n, 2), 16))
    return max(tile, 16)


@functools.partial(jax.jit, static_argnames=("tile_m_max", "out_dtype"))
def netl2_forward(x, prepped, *, tile_m_max=1024, out_dtype=jnp.bfloat16):
    """x: [N, 3] float32.  prepped: output of prepare_params()."""
    n = x.shape[0]
    tile_m = _choose_tile_m(n, tile_m_max)
    grid = (pl.cdiv(n, tile_m),)

    def full(shape):
        # Full tensor, block index pinned at 0 => resident, fetched once.
        return pl.BlockSpec(shape, lambda i: tuple(0 for _ in shape))

    return pl.pallas_call(
        _mlp_kernel,
        out_shape=jax.ShapeDtypeStruct((n, D_OUT), out_dtype),
        grid_spec=pltpu.PrefetchScalarGridSpec(
            num_scalar_prefetch=0,
            grid=grid,
            in_specs=[
                pl.BlockSpec((tile_m, D_IN), lambda i: (i, 0)),  # x tile
                full(prepped["w1"].shape), full(prepped["b1"].shape),
                full(prepped["w2"].shape), full(prepped["b2"].shape),
                full(prepped["w3"].shape), full(prepped["b3"].shape),
            ],
            out_specs=pl.BlockSpec((tile_m, D_OUT), lambda i: (i, 0)),
        ),
        compiler_params=pltpu.CompilerParams(
            dimension_semantics=("parallel",),
            vmem_limit_bytes=32 << 20,  # safe on v5e/v6e/v7x at tile_m<=1024
        ),
    )(x, prepped["w1"], prepped["b1"], prepped["w2"], prepped["b2"],
      prepped["w3"], prepped["b3"])


def init_params(key):
    """Deterministic synthetic init (uniform, roughly like torch's default)."""
    ks = jax.random.split(key, 6)

    def lin(kw, kb, fan_in, fan_out):
        bound = 1.0 / jnp.sqrt(fan_in)
        w = jax.random.uniform(kw, (fan_in, fan_out), jnp.float32, -bound, bound)
        b = jax.random.uniform(kb, (1, fan_out), jnp.float32, -bound, bound)
        return w, b

    w1, b1 = lin(ks[0], ks[1], D_IN, D_H1)
    w2, b2 = lin(ks[2], ks[3], D_H1, D_H2)
    w3, b3 = lin(ks[4], ks[5], D_H2, D_OUT)
    return dict(w1=w1, b1=b1, w2=w2, b2=b2, w3=w3, b3=b3)


def netl2_reference(x, p):
    """Pure-JAX fp32 reference."""
    h1 = jnp.maximum(x @ p["w1"] + p["b1"], 0.0)
    h2 = jax.nn.sigmoid(h1 @ p["w2"] + p["b2"])
    return jax.nn.sigmoid(h2 @ p["w3"] + p["b3"])


if __name__ == "__main__":
    key = jax.random.PRNGKey(0)
    k_params, k_x = jax.random.split(key)

    params = init_params(k_params)
    prepped = prepare_params(params)  # one-time bf16 cast / layout prep

    # posMatrix: a small batch of 3-D positions, [N, 3]
    x = jax.random.normal(k_x, (64, D_IN), jnp.float32)

    out = netl2_forward(x, prepped)
    out = jax.block_until_ready(out)

    ref = netl2_reference(x, params)
    assert out.shape == (64, D_OUT), out.shape
    # bf16 matmul inputs + bf16 output (f32 accumulation) => loosened tolerance.
    max_err = float(jnp.max(jnp.abs(out.astype(jnp.float32) - ref)))
    assert max_err < 2.5e-2, f"mismatch vs reference, max abs err {max_err}"

    print("KERNEL_OK")
</pallas_src>

<mosaic_0001>
module attributes {stable_mosaic.version = 11 : i64} {
  func.func @_mlp_kernel(%arg0: i32, %arg1: memref<32x3xf32, #tpu.memory_space<vmem>>, %arg2: memref<3x512xbf16, #tpu.memory_space<vmem>>, %arg3: memref<1x512xf32, #tpu.memory_space<vmem>>, %arg4: memref<512x256xbf16, #tpu.memory_space<vmem>>, %arg5: memref<1x256xf32, #tpu.memory_space<vmem>>, %arg6: memref<256x192xbf16, #tpu.memory_space<vmem>>, %arg7: memref<1x192xf32, #tpu.memory_space<vmem>>, %arg8: memref<32x192xbf16, #tpu.memory_space<vmem>>) attributes {dimension_semantics = [#tpu.dimension_semantics<parallel>], iteration_bounds = array<i64: 2>, scalar_prefetch = 0 : i64, scratch_operands = 0 : i64, tpu.core_type = #tpu.core_type<tc>, window_params = [{transform_indices = @transform_0, window_bounds = array<i64: 32, 3>}, {pipeline_mode = #tpu.pipeline_mode<synchronous>, transform_indices = @transform_1, window_bounds = array<i64: 3, 512>}, {pipeline_mode = #tpu.pipeline_mode<synchronous>, transform_indices = @transform_2, window_bounds = array<i64: 1, 512>}, {pipeline_mode = #tpu.pipeline_mode<synchronous>, transform_indices = @transform_3, window_bounds = array<i64: 512, 256>}, {pipeline_mode = #tpu.pipeline_mode<synchronous>, transform_indices = @transform_4, window_bounds = array<i64: 1, 256>}, {pipeline_mode = #tpu.pipeline_mode<synchronous>, transform_indices = @transform_5, window_bounds = array<i64: 256, 192>}, {pipeline_mode = #tpu.pipeline_mode<synchronous>, transform_indices = @transform_6, window_bounds = array<i64: 1, 192>}, {transform_indices = @transform_7, window_bounds = array<i64: 32, 192>}]} {
    %c0 = arith.constant 0 : index
    %c0_0 = arith.constant 0 : index
    %0 = vector.load %arg1[%c0, %c0_0] : memref<32x3xf32, #tpu.memory_space<vmem>>, vector<32x3xf32>
    %1 = arith.truncf %0 : vector<32x3xf32> to vector<32x3xbf16>
    %c0_1 = arith.constant 0 : index
    %c0_2 = arith.constant 0 : index
    %2 = vector.load %arg2[%c0_1, %c0_2] : memref<3x512xbf16, #tpu.memory_space<vmem>>, vector<3x512xbf16>
    %cst = arith.constant dense<0.000000e+00> : vector<32x512xf32>
    %3 = tpu.matmul %1, %2, %cst {dimension_numbers = #tpu.dot_dimension_numbers<[1], [0], [0], [1], [0, 0, 1, 1], [], []>} : vector<32x3xbf16>, vector<3x512xbf16>, vector<32x512xf32> -> vector<32x512xf32>
    %c0_3 = arith.constant 0 : index
    %c0_4 = arith.constant 0 : index
    %4 = vector.load %arg3[%c0_3, %c0_4] : memref<1x512xf32, #tpu.memory_space<vmem>>, vector<1x512xf32>
    %5 = vector.broadcast %4 : vector<1x512xf32> to vector<32x512xf32>
    %6 = arith.addf %3, %5 : vector<32x512xf32>
    %cst_5 = arith.constant 0.000000e+00 : f32
    %7 = vector.broadcast %cst_5 : f32 to vector<32x512xf32>
    %8 = arith.maximumf %6, %7 : vector<32x512xf32>
    %9 = arith.truncf %8 : vector<32x512xf32> to vector<32x512xbf16>
    %c0_6 = arith.constant 0 : index
    %c0_7 = arith.constant 0 : index
    %10 = vector.load %arg4[%c0_6, %c0_7] : memref<512x256xbf16, #tpu.memory_space<vmem>>, vector<512x256xbf16>
    %cst_8 = arith.constant dense<0.000000e+00> : vector<32x256xf32>
    %11 = tpu.matmul %9, %10, %cst_8 {dimension_numbers = #tpu.dot_dimension_numbers<[1], [0], [0], [1], [0, 0, 1, 1], [], []>} : vector<32x512xbf16>, vector<512x256xbf16>, vector<32x256xf32> -> vector<32x256xf32>
    %c0_9 = arith.constant 0 : index
    %c0_10 = arith.constant 0 : index
    %12 = vector.load %arg5[%c0_9, %c0_10] : memref<1x256xf32, #tpu.memory_space<vmem>>, vector<1x256xf32>
    %13 = vector.broadcast %12 : vector<1x256xf32> to vector<32x256xf32>
    %14 = arith.addf %11, %13 : vector<32x256xf32>
    %cst_11 = arith.constant 0.000000e+00 : f32
    %15 = vector.broadcast %cst_11 : f32 to vector<32x256xf32>
    %16 = arith.subf %15, %14 : vector<32x256xf32>
    %17 = math.exp %16 : vector<32x256xf32>
    %cst_12 = arith.constant 1.000000e+00 : f32
    %18 = vector.broadcast %cst_12 : f32 to vector<32x256xf32>
    %19 = arith.addf %18, %17 : vector<32x256xf32>
    %20 = tpu.reciprocal %19 {approx = true} : vector<32x256xf32> -> vector<32x256xf32>
    %21 = arith.truncf %20 : vector<32x256xf32> to vector<32x256xbf16>
    %c0_13 = arith.constant 0 : index
    %c0_14 = arith.constant 0 : index
    %22 = vector.load %arg6[%c0_13, %c0_14] : memref<256x192xbf16, #tpu.memory_space<vmem>>, vector<256x192xbf16>
    %cst_15 = arith.constant dense<0.000000e+00> : vector<32x192xf32>
    %23 = tpu.matmul %21, %22, %cst_15 {dimension_numbers = #tpu.dot_dimension_numbers<[1], [0], [0], [1], [0, 0, 1, 1], [], []>} : vector<32x256xbf16>, vector<256x192xbf16>, vector<32x192xf32> -> vector<32x192xf32>
    %c0_16 = arith.constant 0 : index
    %c0_17 = arith.constant 0 : index
    %24 = vector.load %arg7[%c0_16, %c0_17] : memref<1x192xf32, #tpu.memory_space<vmem>>, vector<1x192xf32>
    %25 = vector.broadcast %24 : vector<1x192xf32> to vector<32x192xf32>
    %26 = arith.addf %23, %25 : vector<32x192xf32>
    %cst_18 = arith.constant 0.000000e+00 : f32
    %27 = vector.broadcast %cst_18 : f32 to vector<32x192xf32>
    %28 = arith.subf %27, %26 : vector<32x192xf32>
    %29 = math.exp %28 : vector<32x192xf32>
    %cst_19 = arith.constant 1.000000e+00 : f32
    %30 = vector.broadcast %cst_19 : f32 to vector<32x192xf32>
    %31 = arith.addf %30, %29 : vector<32x192xf32>
    %32 = tpu.reciprocal %31 {approx = true} : vector<32x192xf32> -> vector<32x192xf32>
    %33 = arith.truncf %32 : vector<32x192xf32> to vector<32x192xbf16>
    %c0_20 = arith.constant 0 : index
    %c0_21 = arith.constant 0 : index
    %34 = vector.load %arg8[%c0_20, %c0_21] : memref<32x192xbf16, #tpu.memory_space<vmem>>, vector<32x192xbf16>
    tpu.vector_store %arg8[%c0_20, %c0_21], %33 {strides = array<i32>} : memref<32x192xbf16, #tpu.memory_space<vmem>>, vector<32x192xbf16>,
    return
  }
  func.func @transform_0(%arg0: i32) -> (i32, i32) {
    %c0_i32 = arith.constant 0 : i32
    %c0_i32_0 = arith.constant 0 : i32
    return %arg0, %c0_i32 : i32, i32
  }
  func.func @transform_1(%arg0: i32) -> (i32, i32) {
    %c0_i32 = arith.constant 0 : i32
    %c0_i32_0 = arith.constant 0 : i32
    %c0_i32_1 = arith.constant 0 : i32
    return %c0_i32, %c0_i32_0 : i32, i32
  }
  func.func @transform_2(%arg0: i32) -> (i32, i32) {
    %c0_i32 = arith.constant 0 : i32
    %c0_i32_0 = arith.constant 0 : i32
    %c0_i32_1 = arith.constant 0 : i32
    return %c0_i32, %c0_i32_0 : i32, i32
  }
  func.func @transform_3(%arg0: i32) -> (i32, i32) {
    %c0_i32 = arith.constant 0 : i32
    %c0_i32_0 = arith.constant 0 : i32
    %c0_i32_1 = arith.constant 0 : i32
    return %c0_i32, %c0_i32_0 : i32, i32
  }
  func.func @transform_4(%arg0: i32) -> (i32, i32) {
    %c0_i32 = arith.constant 0 : i32
    %c0_i32_0 = arith.constant 0 : i32
    %c0_i32_1 = arith.constant 0 : i32
    return %c0_i32, %c0_i32_0 : i32, i32
  }
  func.func @transform_5(%arg0: i32) -> (i32, i32) {
    %c0_i32 = arith.constant 0 : i32
    %c0_i32_0 = arith.constant 0 : i32
    %c0_i32_1 = arith.constant 0 : i32
    return %c0_i32, %c0_i32_0 : i32, i32
  }
  func.func @transform_6(%arg0: i32) -> (i32, i32) {
    %c0_i32 = arith.constant 0 : i32
    %c0_i32_0 = arith.constant 0 : i32
    %c0_i32_1 = arith.constant 0 : i32
    return %c0_i32, %c0_i32_0 : i32, i32
  }
  func.func @transform_7(%arg0: i32) -> (i32, i32) {
    %c0_i32 = arith.constant 0 : i32
    %c0_i32_0 = arith.constant 0 : i32
    return %arg0, %c0_i32 : i32, i32
  }
}

</mosaic_0001>

<llo_original>
// kernel: netl2_forward.1
$region0: #{netl2_forward.1}
  #allocation0 [shape = 'u32[]', space=smem, size = 0x4, offset = 0x4, fixed_abs, tag = 'smem constant byte address 0x4 - core index']
  #allocation1 [shape = 'u32[144,128]{1,0:T(1,128)}', space=vmem, size = 0x12000, scoped, tag = 'internal scratch']
  %s0 = inlined_call_operand.vmem [shape: f32[64,3], index: 0, kind: input, shape index: {}]
  %s1 = inlined_call_operand.vmem [shape: bf16[3,512], index: 1, kind: input, shape index: {}]
  %s2 = inlined_call_operand.vmem [shape: f32[1,512], index: 2, kind: input, shape index: {}]
  %s3 = inlined_call_operand.vmem [shape: bf16[512,256], index: 3, kind: input, shape index: {}]
  %s4 = inlined_call_operand.vmem [shape: f32[1,256], index: 4, kind: input, shape index: {}]
  %s5 = inlined_call_operand.vmem [shape: bf16[256,192], index: 5, kind: input, shape index: {}]
  %s6 = inlined_call_operand.vmem [shape: f32[1,192], index: 6, kind: input, shape index: {}]
  %s7 = inlined_call_operand.hbm [shape: bf16[64,192], index: 7, kind: output, shape index: {}]
  %s8 = sld [smem:[#allocation0]]
  $region61: #{netl2_forward.1} parent=0
    _
  %s10 = ssub.s32 1, %s8
  %s11 = scalar_select 0, %s10, %s8
  $region1: #{netl2_forward.1} parent=0
    #allocation2 [shape = 'u8[32768]{0}', space=vmem, size = 0x8000, scoped, tag = 'output window, operand 0']
    #allocation3 [shape = 's32[2]{0}', space=sflag, size = 0x8, scoped, tag = 'scoped memory for netl2_forward.1']
    %12 = vsyncpa [#allocation3], 0
    %s13 = scalar_lea.sflag [#allocation3], 1
    %14 = vsyncpa %s13, 0
    loop: start=0, step=1, limit=4
    $region2: #{netl2_forward.1} parent=1 // loop_pre_header
      _
    $region3: #{netl2_forward.1} parent=1 // loop_header
      %s16 = sphi 0, %s20
      %p17 = scmp.ge.s32.totalorder %s16, 4
      %s26 = sphi 0, %s28
      %s29 = sphi 0, %s26
      %s30 = sphi 0, %s29
      %s46 = sphi 0, %s30
      %s50 = sphi 0, %s50
      %s52 = sphi 0, %s50
      %s53 = sphi 0, %s52
      %s67 = sphi 0, %s53
      %s71 = sphi 0, %s71
      %s73 = sphi 0, %s71
      %s74 = sphi 0, %s73
      %s88 = sphi 0, %s74
      %s92 = sphi 0, %s92
      %s94 = sphi 0, %s92
      %s95 = sphi 0, %s94
      %s109 = sphi 0, %s95
      %s113 = sphi 0, %s113
      %s115 = sphi 0, %s113
      %s116 = sphi 0, %s115
      %s130 = sphi 0, %s116
      %s134 = sphi 0, %s134
      %s136 = sphi 0, %s134
      %s137 = sphi 0, %s136
      %s151 = sphi 0, %s137
      %s155 = sphi 0, %s155
      %s157 = sphi 0, %s155
      %s158 = sphi 0, %s157
      %s172 = sphi 0, %s158
      %s178 = sphi 0, %s180
      %s181 = sphi 0, %s178
      %s182 = sphi 0, %s181
      %s198 = sphi 0, %s182
    $region4: #{netl2_forward.1} parent=1 // loop_header_branch
      %19 = sbr.rel (%p17) target = $region8
    $region5: #{netl2_forward.1} parent=1 // loop_body
      %s21 = ssub.s32 %s16, 1
      %s22 = ssub.s32 %s16, 2
      %s23 = sadd.s32 %s16, 1
      %s24 = ssub.s32 %s16, %s23
      %p25 = scmp.eq.s32.totalorder %s24, 0
      %s27 = sadd.s32 %s26, 1
      %s28 = scalar_select %p25, %s26, %s27
      %p31 = pneg %p25
      %p32 = scmp.eq.s32.totalorder %s16, 1
      %p33 = por %p31, %p32
      %p34 = scmp.ne.s32.totalorder %s26, %s29
      %p35 = scmp.eq.s32.totalorder %s16, 0
      %p36 = por %p34, %p35
      %p37 = scmp.ne.s32.totalorder %s26, %s29
      %p38 = scmp.eq.s32.totalorder %s21, 1
      %p39 = por %p37, %p38
      %p40 = scmp.ne.s32.totalorder %s29, %s30
      %p41 = scmp.eq.s32.totalorder %s21, 0
      %p42 = por %p40, %p41
      %p43 = scmp.ne.s32.totalorder %s29, %s30
      %p44 = scmp.eq.s32.totalorder %s22, 1
      %p45 = por %p43, %p44
      %p47 = scmp.ne.s32.totalorder %s30, %s46
      %p48 = scmp.eq.s32.totalorder %s22, 0
      %p49 = por %p47, %p48
      %s51 = sadd.s32 %s50, 1
      %p54 = scmp.eq.s32.totalorder %s16, 1
      %p55 = scmp.ne.s32.totalorder %s50, %s52
      %p56 = scmp.eq.s32.totalorder %s16, 0
      %p57 = por %p55, %p56
      %p58 = scmp.ne.s32.totalorder %s50, %s52
      %p59 = scmp.eq.s32.totalorder %s21, 1
      %p60 = por %p58, %p59
      %p61 = scmp.ne.s32.totalorder %s52, %s53
      %p62 = scmp.eq.s32.totalorder %s21, 0
      %p63 = por %p61, %p62
      %p64 = scmp.ne.s32.totalorder %s52, %s53
      %p65 = scmp.eq.s32.totalorder %s22, 1
      %p66 = por %p64, %p65
      %p68 = scmp.ne.s32.totalorder %s53, %s67
      %p69 = scmp.eq.s32.totalorder %s22, 0
      %p70 = por %p68, %p69
      %s72 = sadd.s32 %s71, 1
      %p75 = scmp.eq.s32.totalorder %s16, 1
      %p76 = scmp.ne.s32.totalorder %s71, %s73
      %p77 = scmp.eq.s32.totalorder %s16, 0
      %p78 = por %p76, %p77
      %p79 = scmp.ne.s32.totalorder %s71, %s73
      %p80 = scmp.eq.s32.totalorder %s21, 1
      %p81 = por %p79, %p80
      %p82 = scmp.ne.s32.totalorder %s73, %s74
      %p83 = scmp.eq.s32.totalorder %s21, 0
      %p84 = por %p82, %p83
      %p85 = scmp.ne.s32.totalorder %s73, %s74
      %p86 = scmp.eq.s32.totalorder %s22, 1
      %p87 = por %p85, %p86
      %p89 = scmp.ne.s32.totalorder %s74, %s88
      %p90 = scmp.eq.s32.totalorder %s22, 0
      %p91 = por %p89, %p90
      %s93 = sadd.s32 %s92, 1
      %p96 = scmp.eq.s32.totalorder %s16, 1
      %p97 = scmp.ne.s32.totalorder %s92, %s94
      %p98 = scmp.eq.s32.totalorder %s16, 0
      %p99 = por %p97, %p98
      %p100 = scmp.ne.s32.totalorder %s92, %s94
      %p101 = scmp.eq.s32.totalorder %s21, 1
      %p102 = por %p100, %p101
      %p103 = scmp.ne.s32.totalorder %s94, %s95
      %p104 = scmp.eq.s32.totalorder %s21, 0
      %p105 = por %p103, %p104
      %p106 = scmp.ne.s32.totalorder %s94, %s95
      %p107 = scmp.eq.s32.totalorder %s22, 1
      %p108 = por %p106, %p107
      %p110 = scmp.ne.s32.totalorder %s95, %s109
      %p111 = scmp.eq.s32.totalorder %s22, 0
      %p112 = por %p110, %p111
      %s114 = sadd.s32 %s113, 1
      %p117 = scmp.eq.s32.totalorder %s16, 1
      %p118 = scmp.ne.s32.totalorder %s113, %s115
      %p119 = scmp.eq.s32.totalorder %s16, 0
      %p120 = por %p118, %p119
      %p121 = scmp.ne.s32.totalorder %s113, %s115
      %p122 = scmp.eq.s32.totalorder %s21, 1
      %p123 = por %p121, %p122
      %p124 = scmp.ne.s32.totalorder %s115, %s116
      %p125 = scmp.eq.s32.totalorder %s21, 0
      %p126 = por %p124, %p125
      %p127 = scmp.ne.s32.totalorder %s115, %s116
      %p128 = scmp.eq.s32.totalorder %s22, 1
      %p129 = por %p127, %p128
      %p131 = scmp.ne.s32.totalorder %s116, %s130
      %p132 = scmp.eq.s32.totalorder %s22, 0
      %p133 = por %p131, %p132
      %s135 = sadd.s32 %s134, 1
      %p138 = scmp.eq.s32.totalorder %s16, 1
      %p139 = scmp.ne.s32.totalorder %s134, %s136
      %p140 = scmp.eq.s32.totalorder %s16, 0
      %p141 = por %p139, %p140
      %p142 = scmp.ne.s32.totalorder %s134, %s136
      %p143 = scmp.eq.s32.totalorder %s21, 1
      %p144 = por %p142, %p143
      %p145 = scmp.ne.s32.totalorder %s136, %s137
      %p146 = scmp.eq.s32.totalorder %s21, 0
      %p147 = por %p145, %p146
      %p148 = scmp.ne.s32.totalorder %s136, %s137
      %p149 = scmp.eq.s32.totalorder %s22, 1
      %p150 = por %p148, %p149
      %p152 = scmp.ne.s32.totalorder %s137, %s151
      %p153 = scmp.eq.s32.totalorder %s22, 0
      %p154 = por %p152, %p153
      %s156 = sadd.s32 %s155, 1
      %p159 = scmp.eq.s32.totalorder %s16, 1
      %p160 = scmp.ne.s32.totalorder %s155, %s157
      %p161 = scmp.eq.s32.totalorder %s16, 0
      %p162 = por %p160, %p161
      %p163 = scmp.ne.s32.totalorder %s155, %s157
      %p164 = scmp.eq.s32.totalorder %s21, 1
      %p165 = por %p163, %p164
      %p166 = scmp.ne.s32.totalorder %s157, %s158
      %p167 = scmp.eq.s32.totalorder %s21, 0
      %p168 = por %p166, %p167
      %p169 = scmp.ne.s32.totalorder %s157, %s158
      %p170 = scmp.eq.s32.totalorder %s22, 1
      %p171 = por %p169, %p170
      %p173 = scmp.ne.s32.totalorder %s158, %s172
      %p174 = scmp.eq.s32.totalorder %s22, 0
      %p175 = por %p173, %p174
      %s176 = ssub.s32 %s16, %s23
      %p177 = scmp.eq.s32.totalorder %s176, 0
      %s179 = sadd.s32 %s178, 1
      %s180 = scalar_select %p177, %s178, %s179
      %p183 = pneg %p177
      %p184 = scmp.eq.s32.totalorder %s16, 1
      %p185 = por %p183, %p184
      %p186 = scmp.ne.s32.totalorder %s178, %s181
      %p187 = scmp.eq.s32.totalorder %s16, 0
      %p188 = por %p186, %p187
      %p189 = scmp.ne.s32.totalorder %s178, %s181
      %p190 = scmp.eq.s32.totalorder %s21, 1
      %p191 = por %p189, %p190
      %p192 = scmp.ne.s32.totalorder %s181, %s182
      %p193 = scmp.eq.s32.totalorder %s21, 0
      %p194 = por %p192, %p193
      %p195 = scmp.ne.s32.totalorder %s181, %s182
      %p196 = scmp.eq.s32.totalorder %s22, 1
      %p197 = por %p195, %p196
      %p199 = scmp.ne.s32.totalorder %s182, %s198
      %p200 = scmp.eq.s32.totalorder %s22, 0
      %p201 = por %p199, %p200
      %p202 = scmp.le.s32.totalorder 1, %s16
      %p203 = scmp.lt.s32.totalorder %s16, 3
      %p204 = pnand %p202, %p203
      %p205 = pneg %p204
      // Predicated region
      $region9: #{netl2_forward.1} parent=5 // pred_check
        _
      $region10: #{netl2_forward.1} parent=5 // pred_check_branch
        %207 = sbr.rel (%p204) target = $region12
      $region11: #{netl2_forward.1} parent=5 // pred_region
        %s208 = ssub.s32 %s16, 1
        // Predicated region
        $region13: #{netl2_forward.1} parent=11 // pred_check
          %p209 = pneg %p63
        $region14: #{netl2_forward.1} parent=11 // pred_check_branch
          %211 = sbr.rel (%p209) target = $region16
        $region15: #{netl2_forward.1} parent=11 // pred_region
          _
        $region16: #{netl2_forward.1} parent=11 // pred_fallthru
          _
        // Predicated region
        $region17: #{netl2_forward.1} parent=11 // pred_check
          %p212 = pneg %p84
        $region18: #{netl2_forward.1} parent=11 // pred_check_branch
          %214 = sbr.rel (%p212) target = $region20
        $region19: #{netl2_forward.1} parent=11 // pred_region
          _
        $region20: #{netl2_forward.1} parent=11 // pred_fallthru
          _
        // Predicated region
        $region21: #{netl2_forward.1} parent=11 // pred_check
          %p215 = pneg %p105
        $region22: #{netl2_forward.1} parent=11 // pred_check_branch
          %217 = sbr.rel (%p215) target = $region24
        $region23: #{netl2_forward.1} parent=11 // pred_region
          _
        $region24: #{netl2_forward.1} parent=11 // pred_fallthru
          _
        // Predicated region
        $region25: #{netl2_forward.1} parent=11 // pred_check
          %p218 = pneg %p126
        $region26: #{netl2_forward.1} parent=11 // pred_check_branch
          %220 = sbr.rel (%p218) target = $region28
        $region27: #{netl2_forward.1} parent=11 // pred_region
          _
        $region28: #{netl2_forward.1} parent=11 // pred_fallthru
          _
        // Predicated region
        $region29: #{netl2_forward.1} parent=11 // pred_check
          %p221 = pneg %p147
        $region30: #{netl2_forward.1} parent=11 // pred_check_branch
          %223 = sbr.rel (%p221) target = $region32
        $region31: #{netl2_forward.1} parent=11 // pred_region
          _
        $region32: #{netl2_forward.1} parent=11 // pred_fallthru
          _
        // Predicated region
        $region33: #{netl2_forward.1} parent=11 // pred_check
          %p224 = pneg %p168
        $region34: #{netl2_forward.1} parent=11 // pred_check_branch
          %226 = sbr.rel (%p224) target = $region36
        $region35: #{netl2_forward.1} parent=11 // pred_region
          _
        $region36: #{netl2_forward.1} parent=11 // pred_fallthru
          _
      $region12: #{netl2_forward.1} parent=5 // pred_fallthru
        _
      %p227 = scmp.lt.s32.totalorder %s16, 2
      // Predicated region
      $region37: #{netl2_forward.1} parent=5 // pred_check
        %p228 = pneg %p227
      $region38: #{netl2_forward.1} parent=5 // pred_check_branch
        %230 = sbr.rel (%p228) target = $region40
      $region39: #{netl2_forward.1} parent=5 // pred_region
        // Predicated region
        $region41: #{netl2_forward.1} parent=39 // pred_check
          %p231 = pneg %p36
        $region42: #{netl2_forward.1} parent=39 // pred_check_branch
          %233 = sbr.rel (%p231) target = $region44
        $region43: #{netl2_forward.1} parent=39 // pred_region
          %s234 = smul.u32 4, %s16
          %p235 = scmp.lt.s32.totalorder %s234, 7
          %s236 = scalar_select %p235, %s234, 7
          %s237 = smul.addr %s236, 8
          %s238 = scalar_lea.vmem %s0, %s237
          %s239 = smul.u32 4, %s16
        $region44: #{netl2_forward.1} parent=39 // pred_fallthru
          _
      $region40: #{netl2_forward.1} parent=5 // pred_fallthru
        _
      %p240 = scmp.le.s32.totalorder 1, %s16
      %p241 = scmp.lt.s32.totalorder %s16, 3
      %p242 = pnand %p240, %p241
      %p243 = pneg %p242
      // Predicated region
      $region45: #{netl2_forward.1} parent=5 // pred_check
        _
      $region46: #{netl2_forward.1} parent=5 // pred_check_branch
        %245 = sbr.rel (%p242) target = $region48
      $region47: #{netl2_forward.1} parent=5 // pred_region
        %s246 = ssub.s32 %s16, 1
        %s247 = smul.u32 4, %s21
        %p248 = scmp.lt.s32.totalorder %s247, 7
        %s249 = scalar_select %p248, %s247, 7
        %s250 = smul.addr %s249, 8
        %s251 = scalar_lea.vmem %s0, %s250
        %p252 = pneg %p42
        %p253 = pneg %p39
        %p254 = pneg %p63
        %p255 = pneg %p60
        %p256 = pneg %p84
        %p257 = pneg %p81
        %p258 = pneg %p105
        %p259 = pneg %p102
        %p260 = pneg %p126
        %p261 = pneg %p123
        %p262 = pneg %p147
        %p263 = pneg %p144
        %p264 = pneg %p168
        %p265 = pneg %p165
        %p266 = pneg %p194
        %p267 = pneg %p191
        %s268 = sand.u32 %s181, 1
        %s269 = scalar_lea.sflag [#allocation3], %s268
        %s270 = sand.u32 %s181, 1
        %s271 = smul.addr %s270, 32
        %s272 = scalar_lea.vmem [#allocation2], %s271
        %s273 = smul.u32 4, %s21
        %p274 = scmp.lt.s32.totalorder %s273, 7
        %s275 = scalar_select %p274, %s273, 7
        %s276 = smul.addr %s275, 8
        %s277 = scalar_lea.vmem %s0, %s276
        %s278 = smul.u32 4, %s21
        %s279 = smul.u32 4, %s21
        %v281 = vld [vmem:[%s277] sm:$0xff]
        %v282 = vld [vmem:[%s277 + $0x8] sm:$0xff]
        %v283 = vld [vmem:[%s277 + $0x10] sm:$0xff]
        %v284 = vld [vmem:[%s277 + $0x18] sm:$0xff]
        %v285 = vpack.c.bf16 %v282, %v281
        %v286 = vpack.c.bf16 %v284, %v283
        %v287 = vld [vmem:[%s1] sm:$0xff]
        %v288 = vld [vmem:[%s2] sm:$0xf]
        %v290 = vlaneseq
        %v291 = vshrl.u32 %v290, 7
        %v292 = vsub.s32 0, %v291
        %v293 = vrot.slane %v288, %v292
        %v294 = vlaneseq
        %v295 = vshrl.u32 %v294, 7
        %v296 = vsub.s32 1, %v295
        %v297 = vrot.slane %v288, %v296
        %v298 = vlaneseq
        %v299 = vshrl.u32 %v298, 7
        %v300 = vsub.s32 2, %v299
        %v301 = vrot.slane %v288, %v300
        %v302 = vlaneseq
        %v303 = vshrl.u32 %v302, 7
        %v304 = vsub.s32 3, %v303
        %v305 = vrot.slane %v288, %v304
        %v311 = vcombine.high %v287, %v287
        %v313 = vunpack.c.l.s4 1983009808
        %v314 = vunpack.c.0.s8 %v313
        %v315 = vlaneseq
        %v316 = vshrl.u32 %v315, 7
        %v317 = vsub.s32 %v314, %v316
        %v318 = vrot.slane %v287, %v317
        %v320 = vunpack.c.l.s4 1983009808
        %v321 = vunpack.c.0.s8 %v320
        %v322 = vlaneseq
        %v323 = vshrl.u32 %v322, 7
        %v324 = vsub.s32 %v321, %v323
        %v325 = vrot.slane %v311, %v324
        %v326 = vcombine.high %v318, %v318
        %v327 = vcombine.high %v325, %v325
        %vm328 = vcmask 23552
        %v330 = vsel %vm328, %v285, 0
        %v333 = vsel %vm328, %v286, 0
        %vm335 = vcmask 1040384
        %vm336 = vcmask 1041408
        %v337 = vsel %vm335, 4294967295, 65535
        %v338 = vsel %vm336, %v337, 0
        %v340 = vand.u32 %v318, %v338
        %v343 = vand.u32 %v326, %v338
        %v346 = vand.u32 %v325, %v338
        %v349 = vand.u32 %v327, %v338
        %351 = vmatprep.subr.bf16.mxu0 %v343
        %352 = vmatpush1.bf16.msra.mxu0 %v340
        %353 = vmatprep.subr.bf16.mxu0 0
        %354 = vmatpush1.bf16.msra.mxu0 0
        %355 = vmatprep.subr.bf16.mxu0 0
        %356 = vmatpush1.bf16.msra.mxu0 0
        %357 = vmatprep.subr.bf16.mxu0 0
        %358 = vmatpush1.bf16.msra.mxu0 0
        %359 = vmatprep.subr.bf16.mxu0 0
        %360 = vmatpush1.bf16.msra.mxu0 0
        %361 = vmatprep.subr.bf16.mxu0 0
        %362 = vmatpush1.bf16.msra.mxu0 0
        %363 = vmatprep.subr.bf16.mxu0 0
        %364 = vmatpush1.bf16.msra.mxu0 0
        %365 = vmatprep.subr.bf16.mxu0 0
        %366 = vmatpush1.bf16.msra.mxu0 0
        %367 = vmatprep.subr.bf16.mxu0 0
        %368 = vmatpush1.bf16.msra.mxu0 0
        %369 = vmatprep.subr.bf16.mxu0 0
        %370 = vmatpush1.bf16.msra.mxu0 0
        %371 = vmatprep.subr.bf16.mxu0 0
        %372 = vmatpush1.bf16.msra.mxu0 0
        %373 = vmatprep.subr.bf16.mxu0 0
        %374 = vmatpush1.bf16.msra.mxu0 0
        %375 = vmatprep.subr.bf16.mxu0 0
        %376 = vmatpush1.bf16.msra.mxu0 0
        %377 = vmatprep.subr.bf16.mxu0 0
        %378 = vmatpush1.bf16.msra.mxu0 0
        %379 = vmatprep.subr.bf16.mxu0 0
        %380 = vmatpush1.bf16.msra.mxu0 0
        %381 = vmatprep.subr.bf16.mxu0 0
        %382 = vmatpush1.bf16.msra.mxu0 0
        %383 = vmatprep.mubr.bf16.mxu0 0
        %384 = vmatmul.mubr.bf16.gmra.mrb[0].mxu0 %v330
        %v385 = vpop.f32.mrb[0].mxu0
        %v386 = vadd.f32 %v293, %v385
        %v387 = vpop.f32.mrb[0].mxu0
        %v388 = vadd.f32 %v297, %v387
        %v389 = vpop.f32.mrb[0].mxu0
        %v390 = vadd.f32 %v293, %v389
        %v391 = vpop.f32.mrb[0].mxu0
        %v392 = vadd.f32 %v297, %v391
        %393 = vmatprep.mubr.bf16.mxu0 0
        %394 = vmatmul.mubr.bf16.gmra.mrb[0].mxu0 %v333
        %v395 = vpop.f32.mrb[0].mxu0
        %v396 = vadd.f32 %v293, %v395
        %v397 = vpop.f32.mrb[0].mxu0
        %v398 = vadd.f32 %v297, %v397
        %v399 = vpop.f32.mrb[0].mxu0
        %v400 = vadd.f32 %v293, %v399
        %v401 = vpop.f32.mrb[0].mxu0
        %v402 = vadd.f32 %v297, %v401
        %403 = vdwg.mxu0
        %404 = vmatprep.subr.bf16.mxu0 %v349
        %405 = vmatpush1.bf16.msra.mxu0 %v346
        %406 = vmatprep.subr.bf16.mxu0 0
        %407 = vmatpush1.bf16.msra.mxu0 0
        %408 = vmatprep.subr.bf16.mxu0 0
        %409 = vmatpush1.bf16.msra.mxu0 0
        %410 = vmatprep.subr.bf16.mxu0 0
        %411 = vmatpush1.bf16.msra.mxu0 0
        %412 = vmatprep.subr.bf16.mxu0 0
        %413 = vmatpush1.bf16.msra.mxu0 0
        %414 = vmatprep.subr.bf16.mxu0 0
        %415 = vmatpush1.bf16.msra.mxu0 0
        %416 = vmatprep.subr.bf16.mxu0 0
        %417 = vmatpush1.bf16.msra.mxu0 0
        %418 = vmatprep.subr.bf16.mxu0 0
        %419 = vmatpush1.bf16.msra.mxu0 0
        %420 = vmatprep.subr.bf16.mxu0 0
        %421 = vmatpush1.bf16.msra.mxu0 0
        %422 = vmatprep.subr.bf16.mxu0 0
        %423 = vmatpush1.bf16.msra.mxu0 0
        %424 = vmatprep.subr.bf16.mxu0 0
        %425 = vmatpush1.bf16.msra.mxu0 0
        %426 = vmatprep.subr.bf16.mxu0 0
        %427 = vmatpush1.bf16.msra.mxu0 0
        %428 = vmatprep.subr.bf16.mxu0 0
        %429 = vmatpush1.bf16.msra.mxu0 0
        %430 = vmatprep.subr.bf16.mxu0 0
        %431 = vmatpush1.bf16.msra.mxu0 0
        %432 = vmatprep.subr.bf16.mxu0 0
        %433 = vmatpush1.bf16.msra.mxu0 0
        %434 = vmatprep.subr.bf16.mxu0 0
        %435 = vmatpush1.bf16.msra.mxu0 0
        %436 = vmatprep.mubr.bf16.mxu0 0
        %437 = vmatmul.mubr.bf16.gmra.mrb[0].mxu0 %v330
        %v438 = vpop.f32.mrb[0].mxu0
        %v439 = vadd.f32 %v301, %v438
        %v440 = vpop.f32.mrb[0].mxu0
        %v441 = vadd.f32 %v305, %v440
        %v442 = vpop.f32.mrb[0].mxu0
        %v443 = vadd.f32 %v301, %v442
        %v444 = vpop.f32.mrb[0].mxu0
        %v445 = vadd.f32 %v305, %v444
        %446 = vmatprep.mubr.bf16.mxu0 0
        %447 = vmatmul.mubr.bf16.gmra.mrb[0].mxu0 %v333
        %v448 = vpop.f32.mrb[0].mxu0
        %v449 = vadd.f32 %v301, %v448
        %v450 = vpop.f32.mrb[0].mxu0
        %v451 = vadd.f32 %v305, %v450
        %v452 = vpop.f32.mrb[0].mxu0
        %v453 = vadd.f32 %v301, %v452
        %v454 = vpop.f32.mrb[0].mxu0
        %v455 = vadd.f32 %v305, %v454
        %456 = vdwg.mxu0
        %v457 = vmax.f32 %v386, 0.0
        %v458 = vmax.f32 %v388, 0.0
        %v459 = vmax.f32 %v439, 0.0
        %v460 = vmax.f32 %v441, 0.0
        %v461 = vmax.f32 %v390, 0.0
        %v462 = vmax.f32 %v392, 0.0
        %v463 = vmax.f32 %v443, 0.0
        %v464 = vmax.f32 %v445, 0.0
        %v465 = vmax.f32 %v396, 0.0
        %v466 = vmax.f32 %v398, 0.0
        %v467 = vmax.f32 %v449, 0.0
        %v468 = vmax.f32 %v451, 0.0
        %v469 = vmax.f32 %v400, 0.0
        %v470 = vmax.f32 %v402, 0.0
        %v471 = vmax.f32 %v453, 0.0
        %v472 = vmax.f32 %v455, 0.0
        %v473 = vpack.c.bf16 %v461, %v457
        %v474 = vpack.c.bf16 %v462, %v458
        %v475 = vpack.c.bf16 %v463, %v459
        %v476 = vpack.c.bf16 %v464, %v460
        %v477 = vpack.c.bf16 %v469, %v465
        %v478 = vpack.c.bf16 %v470, %v466
        %v479 = vpack.c.bf16 %v471, %v467
        %v480 = vpack.c.bf16 %v472, %v468
        %v481 = vld [vmem:[%s3] sm:$0xff]
        %v482 = vld [vmem:[%s3 + $0x8] sm:$0xff]
        %v483 = vld [vmem:[%s3 + $0x10] sm:$0xff]
        %v484 = vld [vmem:[%s3 + $0x18] sm:$0xff]
        %v485 = vld [vmem:[%s3 + $0x20] sm:$0xff]
        %v486 = vld [vmem:[%s3 + $0x28] sm:$0xff]
        %v487 = vld [vmem:[%s3 + $0x30] sm:$0xff]
        %v488 = vld [vmem:[%s3 + $0x38] sm:$0xff]
        %v489 = vld [vmem:[%s3 + $0x40] sm:$0xff]
        %v490 = vld [vmem:[%s3 + $0x48] sm:$0xff]
        %v491 = vld [vmem:[%s3 + $0x50] sm:$0xff]
        %v492 = vld [vmem:[%s3 + $0x58] sm:$0xff]
        %v493 = vld [vmem:[%s3 + $0x60] sm:$0xff]
        %v494 = vld [vmem:[%s3 + $0x68] sm:$0xff]
        %v495 = vld [vmem:[%s3 + $0x70] sm:$0xff]
        %v496 = vld [vmem:[%s3 + $0x78] sm:$0xff]
        %v497 = vld [vmem:[%s3 + $0x80] sm:$0xff]
        %v498 = vld [vmem:[%s3 + $0x88] sm:$0xff]
        %v499 = vld [vmem:[%s3 + $0x90] sm:$0xff]
        %v500 = vld [vmem:[%s3 + $0x98] sm:$0xff]
        %v501 = vld [vmem:[%s3 + $0xa0] sm:$0xff]
        %v502 = vld [vmem:[%s3 + $0xa8] sm:$0xff]
        %v503 = vld [vmem:[%s3 + $0xb0] sm:$0xff]
        %v504 = vld [vmem:[%s3 + $0xb8] sm:$0xff]
        %v505 = vld [vmem:[%s3 + $0xc0] sm:$0xff]
        %v506 = vld [vmem:[%s3 + $0xc8] sm:$0xff]
        %v507 = vld [vmem:[%s3 + $0xd0] sm:$0xff]
        %v508 = vld [vmem:[%s3 + $0xd8] sm:$0xff]
        %v509 = vld [vmem:[%s3 + $0xe0] sm:$0xff]
        %v510 = vld [vmem:[%s3 + $0xe8] sm:$0xff]
        %v511 = vld [vmem:[%s3 + $0xf0] sm:$0xff]
        %v512 = vld [vmem:[%s3 + $0xf8] sm:$0xff]
        %v513 = vld [vmem:[%s3 + $0x100] sm:$0xff]
        %v514 = vld [vmem:[%s3 + $0x108] sm:$0xff]
        %v515 = vld [vmem:[%s3 + $0x110] sm:$0xff]
        %v516 = vld [vmem:[%s3 + $0x118] sm:$0xff]
        %v517 = vld [vmem:[%s3 + $0x120] sm:$0xff]
        %v518 = vld [vmem:[%s3 + $0x128] sm:$0xff]
        %v519 = vld [vmem:[%s3 + $0x130] sm:$0xff]
        %v520 = vld [vmem:[%s3 + $0x138] sm:$0xff]
        %v521 = vld [vmem:[%s3 + $0x140] sm:$0xff]
        %v522 = vld [vmem:[%s3 + $0x148] sm:$0xff]
        %v523 = vld [vmem:[%s3 + $0x150] sm:$0xff]
        %v524 = vld [vmem:[%s3 + $0x158] sm:$0xff]
        %v525 = vld [vmem:[%s3 + $0x160] sm:$0xff]
        %v526 = vld [vmem:[%s3 + $0x168] sm:$0xff]
        %v527 = vld [vmem:[%s3 + $0x170] sm:$0xff]
        %v528 = vld [vmem:[%s3 + $0x178] sm:$0xff]
        %v529 = vld [vmem:[%s3 + $0x180] sm:$0xff]
        %v530 = vld [vmem:[%s3 + $0x188] sm:$0xff]
        %v531 = vld [vmem:[%s3 + $0x190] sm:$0xff]
        %v532 = vld [vmem:[%s3 + $0x198] sm:$0xff]
        %v533 = vld [vmem:[%s3 + $0x1a0] sm:$0xff]
        %v534 = vld [vmem:[%s3 + $0x1a8] sm:$0xff]
        %v535 = vld [vmem:[%s3 + $0x1b0] sm:$0xff]
        %v536 = vld [vmem:[%s3 + $0x1b8] sm:$0xff]
        %v537 = vld [vmem:[%s3 + $0x1c0] sm:$0xff]
        %v538 = vld [vmem:[%s3 + $0x1c8] sm:$0xff]
        %v539 = vld [vmem:[%s3 + $0x1d0] sm:$0xff]
        %v540 = vld [vmem:[%s3 + $0x1d8] sm:$0xff]
        %v541 = vld [vmem:[%s3 + $0x1e0] sm:$0xff]
        %v542 = vld [vmem:[%s3 + $0x1e8] sm:$0xff]
        %v543 = vld [vmem:[%s3 + $0x1f0] sm:$0xff]
        %v544 = vld [vmem:[%s3 + $0x1f8] sm:$0xff]
        %v545 = vld [vmem:[%s4] sm:$0x3]
        %v547 = vlaneseq
        %v548 = vshrl.u32 %v547, 7
        %v549 = vsub.s32 0, %v548
        %v550 = vrot.slane %v545, %v549
        %v551 = vlaneseq
        %v552 = vshrl.u32 %v551, 7
        %v553 = vsub.s32 1, %v552
        %v554 = vrot.slane %v545, %v553
        %v621 = vunpack.c.l.b16 %v481
        %v622 = vunpack.c.h.b16 %v481
        %v623 = vunpack.c.l.b16 %v482
        %v624 = vunpack.c.h.b16 %v482
        %v625 = vunpack.c.l.b16 %v483
        %v626 = vunpack.c.h.b16 %v483
        %v627 = vunpack.c.l.b16 %v484
        %v628 = vunpack.c.h.b16 %v484
        %v629 = vunpack.c.l.b16 %v485
        %v630 = vunpack.c.h.b16 %v485
        %v631 = vunpack.c.l.b16 %v486
        %v632 = vunpack.c.h.b16 %v486
        %v633 = vunpack.c.l.b16 %v487
        %v634 = vunpack.c.h.b16 %v487
        %v635 = vunpack.c.l.b16 %v488
        %v636 = vunpack.c.h.b16 %v488
        %v637 = vunpack.c.l.b16 %v489
        %v638 = vunpack.c.h.b16 %v489
        %v639 = vunpack.c.l.b16 %v490
        %v640 = vunpack.c.h.b16 %v490
        %v641 = vunpack.c.l.b16 %v491
        %v642 = vunpack.c.h.b16 %v491
        %v643 = vunpack.c.l.b16 %v492
        %v644 = vunpack.c.h.b16 %v492
        %v645 = vunpack.c.l.b16 %v493
        %v646 = vunpack.c.h.b16 %v493
        %v647 = vunpack.c.l.b16 %v494
        %v648 = vunpack.c.h.b16 %v494
        %v649 = vunpack.c.l.b16 %v495
        %v650 = vunpack.c.h.b16 %v495
        %v651 = vunpack.c.l.b16 %v496
        %v652 = vunpack.c.h.b16 %v496
        %v653 = vunpack.c.l.b16 %v497
        %v654 = vunpack.c.h.b16 %v497
        %v655 = vunpack.c.l.b16 %v498
        %v656 = vunpack.c.h.b16 %v498
        %v657 = vunpack.c.l.b16 %v499
        %v658 = vunpack.c.h.b16 %v499
        %v659 = vunpack.c.l.b16 %v500
        %v660 = vunpack.c.h.b16 %v500
        %v661 = vunpack.c.l.b16 %v501
        %v662 = vunpack.c.h.b16 %v501
        %v663 = vunpack.c.l.b16 %v502
        %v664 = vunpack.c.h.b16 %v502
        %v665 = vunpack.c.l.b16 %v503
        %v666 = vunpack.c.h.b16 %v503
        %v667 = vunpack.c.l.b16 %v504
        %v668 = vunpack.c.h.b16 %v504
        %v669 = vunpack.c.l.b16 %v505
        %v670 = vunpack.c.h.b16 %v505
        %v671 = vunpack.c.l.b16 %v506
        %v672 = vunpack.c.h.b16 %v506
        %v673 = vunpack.c.l.b16 %v507
        %v674 = vunpack.c.h.b16 %v507
        %v675 = vunpack.c.l.b16 %v508
        %v676 = vunpack.c.h.b16 %v508
        %v677 = vunpack.c.l.b16 %v509
        %v678 = vunpack.c.h.b16 %v509
        %v679 = vunpack.c.l.b16 %v510
        %v680 = vunpack.c.h.b16 %v510
        %v681 = vunpack.c.l.b16 %v511
        %v682 = vunpack.c.h.b16 %v511
        %v683 = vunpack.c.l.b16 %v512
        %v684 = vunpack.c.h.b16 %v512
        %v685 = vunpack.c.l.b16 %v513
        %v686 = vunpack.c.h.b16 %v513
        %v687 = vunpack.c.l.b16 %v514
        %v688 = vunpack.c.h.b16 %v514
        %v689 = vunpack.c.l.b16 %v515
        %v690 = vunpack.c.h.b16 %v515
        %v691 = vunpack.c.l.b16 %v516
        %v692 = vunpack.c.h.b16 %v516
        %v693 = vunpack.c.l.b16 %v517
        %v694 = vunpack.c.h.b16 %v517
        %v695 = vunpack.c.l.b16 %v518
        %v696 = vunpack.c.h.b16 %v518
        %v697 = vunpack.c.l.b16 %v519
        %v698 = vunpack.c.h.b16 %v519
        %v699 = vunpack.c.l.b16 %v520
        %v700 = vunpack.c.h.b16 %v520
        %v701 = vunpack.c.l.b16 %v521
        %v702 = vunpack.c.h.b16 %v521
        %v703 = vunpack.c.l.b16 %v522
        %v704 = vunpack.c.h.b16 %v522
        %v705 = vunpack.c.l.b16 %v523
        %v706 = vunpack.c.h.b16 %v523
        %v707 = vunpack.c.l.b16 %v524
        %v708 = vunpack.c.h.b16 %v524
        %v709 = vunpack.c.l.b16 %v525
        %v710 = vunpack.c.h.b16 %v525
        %v711 = vunpack.c.l.b16 %v526
        %v712 = vunpack.c.h.b16 %v526
        %v713 = vunpack.c.l.b16 %v527
        %v714 = vunpack.c.h.b16 %v527
        %v715 = vunpack.c.l.b16 %v528
        %v716 = vunpack.c.h.b16 %v528
        %v717 = vunpack.c.l.b16 %v529
        %v718 = vunpack.c.h.b16 %v529
        %v719 = vunpack.c.l.b16 %v530
        %v720 = vunpack.c.h.b16 %v530
        %v721 = vunpack.c.l.b16 %v531
        %v722 = vunpack.c.h.b16 %v531
        %v723 = vunpack.c.l.b16 %v532
        %v724 = vunpack.c.h.b16 %v532
        %v725 = vunpack.c.l.b16 %v533
        %v726 = vunpack.c.h.b16 %v533
        %v727 = vunpack.c.l.b16 %v534
        %v728 = vunpack.c.h.b16 %v534
        %v729 = vunpack.c.l.b16 %v535
        %v730 = vunpack.c.h.b16 %v535
        %v731 = vunpack.c.l.b16 %v536
        %v732 = vunpack.c.h.b16 %v536
        %v733 = vunpack.c.l.b16 %v537
        %v734 = vunpack.c.h.b16 %v537
        %v735 = vunpack.c.l.b16 %v538
        %v736 = vunpack.c.h.b16 %v538
        %v737 = vunpack.c.l.b16 %v539
        %v738 = vunpack.c.h.b16 %v539
        %v739 = vunpack.c.l.b16 %v540
        %v740 = vunpack.c.h.b16 %v540
        %v741 = vunpack.c.l.b16 %v541
        %v742 = vunpack.c.h.b16 %v541
        %v743 = vunpack.c.l.b16 %v542
        %v744 = vunpack.c.h.b16 %v542
        %v745 = vunpack.c.l.b16 %v543
        %v746 = vunpack.c.h.b16 %v543
        %v747 = vunpack.c.l.b16 %v544
        %v748 = vunpack.c.h.b16 %v544
        %v749 = vpack.c.b16 %v623, %v621
        %v750 = vpack.c.b16 %v624, %v622
        %v751 = vpack.c.b16 %v627, %v625
        %v752 = vpack.c.b16 %v628, %v626
        %v753 = vpack.c.b16 %v631, %v629
        %v754 = vpack.c.b16 %v632, %v630
        %v755 = vpack.c.b16 %v635, %v633
        %v756 = vpack.c.b16 %v636, %v634
        %v757 = vpack.c.b16 %v639, %v637
        %v758 = vpack.c.b16 %v640, %v638
        %v759 = vpack.c.b16 %v643, %v641
        %v760 = vpack.c.b16 %v644, %v642
        %v761 = vpack.c.b16 %v647, %v645
        %v762 = vpack.c.b16 %v648, %v646
        %v763 = vpack.c.b16 %v651, %v649
        %v764 = vpack.c.b16 %v652, %v650
        %v765 = vpack.c.b16 %v655, %v653
        %v766 = vpack.c.b16 %v656, %v654
        %v767 = vpack.c.b16 %v659, %v657
        %v768 = vpack.c.b16 %v660, %v658
        %v769 = vpack.c.b16 %v663, %v661
        %v770 = vpack.c.b16 %v664, %v662
        %v771 = vpack.c.b16 %v667, %v665
        %v772 = vpack.c.b16 %v668, %v666
        %v773 = vpack.c.b16 %v671, %v669
        %v774 = vpack.c.b16 %v672, %v670
        %v775 = vpack.c.b16 %v675, %v673
        %v776 = vpack.c.b16 %v676, %v674
        %v777 = vpack.c.b16 %v679, %v677
        %v778 = vpack.c.b16 %v680, %v678
        %v779 = vpack.c.b16 %v683, %v681
        %v780 = vpack.c.b16 %v684, %v682
        %v781 = vpack.c.b16 %v687, %v685
        %v782 = vpack.c.b16 %v688, %v686
        %v783 = vpack.c.b16 %v691, %v689
        %v784 = vpack.c.b16 %v692, %v690
        %v785 = vpack.c.b16 %v695, %v693
        %v786 = vpack.c.b16 %v696, %v694
        %v787 = vpack.c.b16 %v699, %v697
        %v788 = vpack.c.b16 %v700, %v698
        %v789 = vpack.c.b16 %v703, %v701
        %v790 = vpack.c.b16 %v704, %v702
        %v791 = vpack.c.b16 %v707, %v705
        %v792 = vpack.c.b16 %v708, %v706
        %v793 = vpack.c.b16 %v711, %v709
        %v794 = vpack.c.b16 %v712, %v710
        %v795 = vpack.c.b16 %v715, %v713
        %v796 = vpack.c.b16 %v716, %v714
        %v797 = vpack.c.b16 %v719, %v717
        %v798 = vpack.c.b16 %v720, %v718
        %v799 = vpack.c.b16 %v723, %v721
        %v800 = vpack.c.b16 %v724, %v722
        %v801 = vpack.c.b16 %v727, %v725
        %v802 = vpack.c.b16 %v728, %v726
        %v803 = vpack.c.b16 %v731, %v729
        %v804 = vpack.c.b16 %v732, %v730
        %v805 = vpack.c.b16 %v735, %v733
        %v806 = vpack.c.b16 %v736, %v734
        %v807 = vpack.c.b16 %v739, %v737
        %v808 = vpack.c.b16 %v740, %v738
        %v809 = vpack.c.b16 %v743, %v741
        %v810 = vpack.c.b16 %v744, %v742
        %v811 = vpack.c.b16 %v747, %v745
        %v812 = vpack.c.b16 %v748, %v746
        %877 = vmatprep.subr.bf16.mxu0 %v750
        %878 = vmatpush1.bf16.msra.mxu0 %v749
        %879 = vmatprep.subr.bf16.mxu0 %v752
        %880 = vmatpush1.bf16.msra.mxu0 %v751
        %881 = vmatprep.subr.bf16.mxu0 %v754
        %882 = vmatpush1.bf16.msra.mxu0 %v753
        %883 = vmatprep.subr.bf16.mxu0 %v756
        %884 = vmatpush1.bf16.msra.mxu0 %v755
        %885 = vmatprep.subr.bf16.mxu0 %v758
        %886 = vmatpush1.bf16.msra.mxu0 %v757
        %887 = vmatprep.subr.bf16.mxu0 %v760
        %888 = vmatpush1.bf16.msra.mxu0 %v759
        %889 = vmatprep.subr.bf16.mxu0 %v762
        %890 = vmatpush1.bf16.msra.mxu0 %v761
        %891 = vmatprep.subr.bf16.mxu0 %v764
        %892 = vmatpush1.bf16.msra.mxu0 %v763
        %893 = vmatprep.subr.bf16.mxu0 %v766
        %894 = vmatpush1.bf16.msra.mxu0 %v765
        %895 = vmatprep.subr.bf16.mxu0 %v768
        %896 = vmatpush1.bf16.msra.mxu0 %v767
        %897 = vmatprep.subr.bf16.mxu0 %v770
        %898 = vmatpush1.bf16.msra.mxu0 %v769
        %899 = vmatprep.subr.bf16.mxu0 %v772
        %900 = vmatpush1.bf16.msra.mxu0 %v771
        %901 = vmatprep.subr.bf16.mxu0 %v774
        %902 = vmatpush1.bf16.msra.mxu0 %v773
        %903 = vmatprep.subr.bf16.mxu0 %v776
        %904 = vmatpush1.bf16.msra.mxu0 %v775
        %905 = vmatprep.subr.bf16.mxu0 %v778
        %906 = vmatpush1.bf16.msra.mxu0 %v777
        %907 = vmatprep.subr.bf16.mxu0 %v780
        %908 = vmatpush1.bf16.msra.mxu0 %v779
        %909 = vmatprep.mubr.bf16.mxu0 %v474
        %910 = vmatmul.mubr.bf16.gmra.mrb[0].mxu0 %v473
        %v911 = vpop.f32.mrb[0].mxu0
        %v912 = vadd.f32 %v550, %v911
        %v913 = vpop.f32.mrb[0].mxu0
        %v914 = vadd.f32 %v554, %v913
        %v915 = vpop.f32.mrb[0].mxu0
        %v916 = vadd.f32 %v550, %v915
        %v917 = vpop.f32.mrb[0].mxu0
        %v918 = vadd.f32 %v554, %v917
        %919 = vmatprep.mubr.bf16.mxu0 %v478
        %920 = vmatmul.mubr.bf16.gmra.mrb[0].mxu0 %v477
        %v921 = vpop.f32.mrb[0].mxu0
        %v922 = vadd.f32 %v550, %v921
        %v923 = vpop.f32.mrb[0].mxu0
        %v924 = vadd.f32 %v554, %v923
        %v925 = vpop.f32.mrb[0].mxu0
        %v926 = vadd.f32 %v550, %v925
        %v927 = vpop.f32.mrb[0].mxu0
        %v928 = vadd.f32 %v554, %v927
        %929 = vdwg.mxu0
        %930 = vmatprep.subr.bf16.mxu0 %v782
        %931 = vmatpush1.bf16.msra.mxu0 %v781
        %932 = vmatprep.subr.bf16.mxu0 %v784
        %933 = vmatpush1.bf16.msra.mxu0 %v783
        %934 = vmatprep.subr.bf16.mxu0 %v786
        %935 = vmatpush1.bf16.msra.mxu0 %v785
        %936 = vmatprep.subr.bf16.mxu0 %v788
        %937 = vmatpush1.bf16.msra.mxu0 %v787
        %938 = vmatprep.subr.bf16.mxu0 %v790
        %939 = vmatpush1.bf16.msra.mxu0 %v789
        %940 = vmatprep.subr.bf16.mxu0 %v792
        %941 = vmatpush1.bf16.msra.mxu0 %v791
        %942 = vmatprep.subr.bf16.mxu0 %v794
        %943 = vmatpush1.bf16.msra.mxu0 %v793
        %944 = vmatprep.subr.bf16.mxu0 %v796
        %945 = vmatpush1.bf16.msra.mxu0 %v795
        %946 = vmatprep.subr.bf16.mxu0 %v798
        %947 = vmatpush1.bf16.msra.mxu0 %v797
        %948 = vmatprep.subr.bf16.mxu0 %v800
        %949 = vmatpush1.bf16.msra.mxu0 %v799
        %950 = vmatprep.subr.bf16.mxu0 %v802
        %951 = vmatpush1.bf16.msra.mxu0 %v801
        %952 = vmatprep.subr.bf16.mxu0 %v804
        %953 = vmatpush1.bf16.msra.mxu0 %v803
        %954 = vmatprep.subr.bf16.mxu0 %v806
        %955 = vmatpush1.bf16.msra.mxu0 %v805
        %956 = vmatprep.subr.bf16.mxu0 %v808
        %957 = vmatpush1.bf16.msra.mxu0 %v807
        %958 = vmatprep.subr.bf16.mxu0 %v810
        %959 = vmatpush1.bf16.msra.mxu0 %v809
        %960 = vmatprep.subr.bf16.mxu0 %v812
        %961 = vmatpush1.bf16.msra.mxu0 %v811
        %962 = vmatprep.mubr.bf16.mxu0 %v476
        %963 = vmatmul.mubr.bf16.gmra.mrb[0].mxu0 %v475
        %v964 = vpop.f32.mrb[0].mxu0
        %v965 = vadd.f32 %v912, %v964
        %v966 = vpop.f32.mrb[0].mxu0
        %v967 = vadd.f32 %v914, %v966
        %v968 = vpop.f32.mrb[0].mxu0
        %v969 = vadd.f32 %v916, %v968
        %v970 = vpop.f32.mrb[0].mxu0
        %v971 = vadd.f32 %v918, %v970
        %972 = vmatprep.mubr.bf16.mxu0 %v480
        %973 = vmatmul.mubr.bf16.gmra.mrb[0].mxu0 %v479
        %v974 = vpop.f32.mrb[0].mxu0
        %v975 = vadd.f32 %v922, %v974
        %v976 = vpop.f32.mrb[0].mxu0
        %v977 = vadd.f32 %v924, %v976
        %v978 = vpop.f32.mrb[0].mxu0
        %v979 = vadd.f32 %v926, %v978
        %v980 = vpop.f32.mrb[0].mxu0
        %v981 = vadd.f32 %v928, %v980
        %982 = vdwg.mxu0
        %v983 = vsub.f32 0.0, %v965
        %v984 = vsub.f32 0.0, %v967
        %v985 = vsub.f32 0.0, %v969
        %v986 = vsub.f32 0.0, %v971
        %v987 = vsub.f32 0.0, %v975
        %v988 = vsub.f32 0.0, %v977
        %v989 = vsub.f32 0.0, %v979
        %v990 = vsub.f32 0.0, %v981
        %v991 = vmul.f32 %v983, 1.442695
        %v992 = vpow.pop %v991
        %v993 = vmul.f32 %v984, 1.442695
        %v994 = vpow.pop %v993
        %v995 = vmul.f32 %v985, 1.442695
        %v996 = vpow.pop %v995
        %v997 = vmul.f32 %v986, 1.442695
        %v998 = vpow.pop %v997
        %v999 = vmul.f32 %v987, 1.442695
        %v1000 = vpow.pop %v999
        %v1001 = vmul.f32 %v988, 1.442695
        %v1002 = vpow.pop %v1001
        %v1003 = vmul.f32 %v989, 1.442695
        %v1004 = vpow.pop %v1003
        %v1005 = vmul.f32 %v990, 1.442695
        %v1006 = vpow.pop %v1005
        %v1007 = vadd.f32 %v992, 1.0
        %v1008 = vadd.f32 %v994, 1.0
        %v1009 = vadd.f32 %v996, 1.0
        %v1010 = vadd.f32 %v998, 1.0
        %v1011 = vadd.f32 %v1000, 1.0
        %v1012 = vadd.f32 %v1002, 1.0
        %v1013 = vadd.f32 %v1004, 1.0
        %v1014 = vadd.f32 %v1006, 1.0
        %v1015 = vrcp.pop %v1007
        %v1016 = vrcp.pop %v1008
        %v1017 = vrcp.pop %v1009
        %v1018 = vrcp.pop %v1010
        %v1019 = vrcp.pop %v1011
        %v1020 = vrcp.pop %v1012
        %v1021 = vrcp.pop %v1013
        %v1022 = vrcp.pop %v1014
        %v1023 = vpack.c.bf16 %v1017, %v1015
        %v1024 = vpack.c.bf16 %v1018, %v1016
        %v1025 = vpack.c.bf16 %v1021, %v1019
        %v1026 = vpack.c.bf16 %v1022, %v1020
        %v1027 = vld [vmem:[%s5] sm:$0xff]
        %v1028 = vld [vmem:[%s5 + $0x8] sm:$0xff]
        %v1029 = vld [vmem:[%s5 + $0x10] sm:$0xff]
        %v1030 = vld [vmem:[%s5 + $0x18] sm:$0xff]
        %v1031 = vld [vmem:[%s5 + $0x20] sm:$0xff]
        %v1032 = vld [vmem:[%s5 + $0x28] sm:$0xff]
        %v1033 = vld [vmem:[%s5 + $0x30] sm:$0xff]
        %v1034 = vld [vmem:[%s5 + $0x38] sm:$0xff]
        %v1035 = vld [vmem:[%s5 + $0x40] sm:$0xff]
        %v1036 = vld [vmem:[%s5 + $0x48] sm:$0xff]
        %v1037 = vld [vmem:[%s5 + $0x50] sm:$0xff]
        %v1038 = vld [vmem:[%s5 + $0x58] sm:$0xff]
        %v1039 = vld [vmem:[%s5 + $0x60] sm:$0xff]
        %v1040 = vld [vmem:[%s5 + $0x68] sm:$0xff]
        %v1041 = vld [vmem:[%s5 + $0x70] sm:$0xff]
        %v1042 = vld [vmem:[%s5 + $0x78] sm:$0xff]
        %v1043 = vld [vmem:[%s5 + $0x80] sm:$0xff]
        %v1044 = vld [vmem:[%s5 + $0x88] sm:$0xff]
        %v1045 = vld [vmem:[%s5 + $0x90] sm:$0xff]
        %v1046 = vld [vmem:[%s5 + $0x98] sm:$0xff]
        %v1047 = vld [vmem:[%s5 + $0xa0] sm:$0xff]
        %v1048 = vld [vmem:[%s5 + $0xa8] sm:$0xff]
        %v1049 = vld [vmem:[%s5 + $0xb0] sm:$0xff]
        %v1050 = vld [vmem:[%s5 + $0xb8] sm:$0xff]
        %v1051 = vld [vmem:[%s5 + $0xc0] sm:$0xff]
        %v1052 = vld [vmem:[%s5 + $0xc8] sm:$0xff]
        %v1053 = vld [vmem:[%s5 + $0xd0] sm:$0xff]
        %v1054 = vld [vmem:[%s5 + $0xd8] sm:$0xff]
        %v1055 = vld [vmem:[%s5 + $0xe0] sm:$0xff]
        %v1056 = vld [vmem:[%s5 + $0xe8] sm:$0xff]
        %v1057 = vld [vmem:[%s5 + $0xf0] sm:$0xff]
        %v1058 = vld [vmem:[%s5 + $0xf8] sm:$0xff]
        %v1059 = vld [vmem:[%s6] sm:$0x3]
        %v1061 = vlaneseq
        %v1062 = vshrl.u32 %v1061, 7
        %v1063 = vsub.s32 0, %v1062
        %v1064 = vrot.slane %v1059, %v1063
        %v1065 = vlaneseq
        %v1066 = vshrl.u32 %v1065, 7
        %v1067 = vsub.s32 1, %v1066
        %v1068 = vrot.slane %v1059, %v1067
        %v1103 = vunpack.c.l.b16 %v1027
        %v1104 = vunpack.c.h.b16 %v1027
        %v1105 = vunpack.c.l.b16 %v1028
        %v1106 = vunpack.c.h.b16 %v1028
        %v1107 = vunpack.c.l.b16 %v1029
        %v1108 = vunpack.c.h.b16 %v1029
        %v1109 = vunpack.c.l.b16 %v1030
        %v1110 = vunpack.c.h.b16 %v1030
        %v1111 = vunpack.c.l.b16 %v1031
        %v1112 = vunpack.c.h.b16 %v1031
        %v1113 = vunpack.c.l.b16 %v1032
        %v1114 = vunpack.c.h.b16 %v1032
        %v1115 = vunpack.c.l.b16 %v1033
        %v1116 = vunpack.c.h.b16 %v1033
        %v1117 = vunpack.c.l.b16 %v1034
        %v1118 = vunpack.c.h.b16 %v1034
        %v1119 = vunpack.c.l.b16 %v1035
        %v1120 = vunpack.c.h.b16 %v1035
        %v1121 = vunpack.c.l.b16 %v1036
        %v1122 = vunpack.c.h.b16 %v1036
        %v1123 = vunpack.c.l.b16 %v1037
        %v1124 = vunpack.c.h.b16 %v1037
        %v1125 = vunpack.c.l.b16 %v1038
        %v1126 = vunpack.c.h.b16 %v1038
        %v1127 = vunpack.c.l.b16 %v1039
        %v1128 = vunpack.c.h.b16 %v1039
        %v1129 = vunpack.c.l.b16 %v1040
        %v1130 = vunpack.c.h.b16 %v1040
        %v1131 = vunpack.c.l.b16 %v1041
        %v1132 = vunpack.c.h.b16 %v1041
        %v1133 = vunpack.c.l.b16 %v1042
        %v1134 = vunpack.c.h.b16 %v1042
        %v1135 = vunpack.c.l.b16 %v1043
        %v1136 = vunpack.c.h.b16 %v1043
        %v1137 = vunpack.c.l.b16 %v1044
        %v1138 = vunpack.c.h.b16 %v1044
        %v1139 = vunpack.c.l.b16 %v1045
        %v1140 = vunpack.c.h.b16 %v1045
        %v1141 = vunpack.c.l.b16 %v1046
        %v1142 = vunpack.c.h.b16 %v1046
        %v1143 = vunpack.c.l.b16 %v1047
        %v1144 = vunpack.c.h.b16 %v1047
        %v1145 = vunpack.c.l.b16 %v1048
        %v1146 = vunpack.c.h.b16 %v1048
        %v1147 = vunpack.c.l.b16 %v1049
        %v1148 = vunpack.c.h.b16 %v1049
        %v1149 = vunpack.c.l.b16 %v1050
        %v1150 = vunpack.c.h.b16 %v1050
        %v1151 = vunpack.c.l.b16 %v1051
        %v1152 = vunpack.c.h.b16 %v1051
        %v1153 = vunpack.c.l.b16 %v1052
        %v1154 = vunpack.c.h.b16 %v1052
        %v1155 = vunpack.c.l.b16 %v1053
        %v1156 = vunpack.c.h.b16 %v1053
        %v1157 = vunpack.c.l.b16 %v1054
        %v1158 = vunpack.c.h.b16 %v1054
        %v1159 = vunpack.c.l.b16 %v1055
        %v1160 = vunpack.c.h.b16 %v1055
        %v1161 = vunpack.c.l.b16 %v1056
        %v1162 = vunpack.c.h.b16 %v1056
        %v1163 = vunpack.c.l.b16 %v1057
        %v1164 = vunpack.c.h.b16 %v1057
        %v1165 = vunpack.c.l.b16 %v1058
        %v1166 = vunpack.c.h.b16 %v1058
        %v1167 = vpack.c.b16 %v1105, %v1103
        %v1168 = vpack.c.b16 %v1106, %v1104
        %v1169 = vpack.c.b16 %v1109, %v1107
        %v1170 = vpack.c.b16 %v1110, %v1108
        %v1171 = vpack.c.b16 %v1113, %v1111
        %v1172 = vpack.c.b16 %v1114, %v1112
        %v1173 = vpack.c.b16 %v1117, %v1115
        %v1174 = vpack.c.b16 %v1118, %v1116
        %v1175 = vpack.c.b16 %v1121, %v1119
        %v1176 = vpack.c.b16 %v1122, %v1120
        %v1177 = vpack.c.b16 %v1125, %v1123
        %v1178 = vpack.c.b16 %v1126, %v1124
        %v1179 = vpack.c.b16 %v1129, %v1127
        %v1180 = vpack.c.b16 %v1130, %v1128
        %v1181 = vpack.c.b16 %v1133, %v1131
        %v1182 = vpack.c.b16 %v1134, %v1132
        %v1183 = vpack.c.b16 %v1137, %v1135
        %v1184 = vpack.c.b16 %v1138, %v1136
        %v1185 = vpack.c.b16 %v1141, %v1139
        %v1186 = vpack.c.b16 %v1142, %v1140
        %v1187 = vpack.c.b16 %v1145, %v1143
        %v1188 = vpack.c.b16 %v1146, %v1144
        %v1189 = vpack.c.b16 %v1149, %v1147
        %v1190 = vpack.c.b16 %v1150, %v1148
        %v1191 = vpack.c.b16 %v1153, %v1151
        %v1192 = vpack.c.b16 %v1154, %v1152
        %v1193 = vpack.c.b16 %v1157, %v1155
        %v1194 = vpack.c.b16 %v1158, %v1156
        %v1195 = vpack.c.b16 %v1161, %v1159
        %v1196 = vpack.c.b16 %v1162, %v1160
        %v1197 = vpack.c.b16 %v1165, %v1163
        %v1198 = vpack.c.b16 %v1166, %v1164
        %1231 = vmatprep.subr.bf16.mxu0 %v1168
        %1232 = vmatpush1.bf16.msra.mxu0 %v1167
        %1233 = vmatprep.subr.bf16.mxu0 %v1170
        %1234 = vmatpush1.bf16.msra.mxu0 %v1169
        %1235 = vmatprep.subr.bf16.mxu0 %v1172
        %1236 = vmatpush1.bf16.msra.mxu0 %v1171
        %1237 = vmatprep.subr.bf16.mxu0 %v1174
        %1238 = vmatpush1.bf16.msra.mxu0 %v1173
        %1239 = vmatprep.subr.bf16.mxu0 %v1176
        %1240 = vmatpush1.bf16.msra.mxu0 %v1175
        %1241 = vmatprep.subr.bf16.mxu0 %v1178
        %1242 = vmatpush1.bf16.msra.mxu0 %v1177
        %1243 = vmatprep.subr.bf16.mxu0 %v1180
        %1244 = vmatpush1.bf16.msra.mxu0 %v1179
        %1245 = vmatprep.subr.bf16.mxu0 %v1182
        %1246 = vmatpush1.bf16.msra.mxu0 %v1181
        %1247 = vmatprep.subr.bf16.mxu0 %v1184
        %1248 = vmatpush1.bf16.msra.mxu0 %v1183
        %1249 = vmatprep.subr.bf16.mxu0 %v1186
        %1250 = vmatpush1.bf16.msra.mxu0 %v1185
        %1251 = vmatprep.subr.bf16.mxu0 %v1188
        %1252 = vmatpush1.bf16.msra.mxu0 %v1187
        %1253 = vmatprep.subr.bf16.mxu0 %v1190
        %1254 = vmatpush1.bf16.msra.mxu0 %v1189
        %1255 = vmatprep.subr.bf16.mxu0 %v1192
        %1256 = vmatpush1.bf16.msra.mxu0 %v1191
        %1257 = vmatprep.subr.bf16.mxu0 %v1194
        %1258 = vmatpush1.bf16.msra.mxu0 %v1193
        %1259 = vmatprep.subr.bf16.mxu0 %v1196
        %1260 = vmatpush1.bf16.msra.mxu0 %v1195
        %1261 = vmatprep.subr.bf16.mxu0 %v1198
        %1262 = vmatpush1.bf16.msra.mxu0 %v1197
        %1263 = vmatprep.mubr.bf16.mxu0 %v1024
        %1264 = vmatmul.mubr.bf16.gmra.mrb[0].mxu0 %v1023
        %v1265 = vpop.f32.mrb[0].mxu0
        %v1266 = vadd.f32 %v1064, %v1265
        %v1267 = vpop.f32.mrb[0].mxu0
        %v1268 = vadd.f32 %v1068, %v1267
        %v1269 = vpop.f32.mrb[0].mxu0
        %v1270 = vadd.f32 %v1064, %v1269
        %v1271 = vpop.f32.mrb[0].mxu0
        %v1272 = vadd.f32 %v1068, %v1271
        %1273 = vmatprep.mubr.bf16.mxu0 %v1026
        %1274 = vmatmul.mubr.bf16.gmra.mrb[0].mxu0 %v1025
        %v1275 = vpop.f32.mrb[0].mxu0
        %v1276 = vadd.f32 %v1064, %v1275
        %v1277 = vpop.f32.mrb[0].mxu0
        %v1278 = vadd.f32 %v1068, %v1277
        %v1279 = vpop.f32.mrb[0].mxu0
        %v1280 = vadd.f32 %v1064, %v1279
        %v1281 = vpop.f32.mrb[0].mxu0
        %v1282 = vadd.f32 %v1068, %v1281
        %1283 = vdwg.mxu0
        %v1284 = vsub.f32 0.0, %v1266
        %v1285 = vsub.f32 0.0, %v1268
        %v1286 = vsub.f32 0.0, %v1270
        %v1287 = vsub.f32 0.0, %v1272
        %v1288 = vsub.f32 0.0, %v1276
        %v1289 = vsub.f32 0.0, %v1278
        %v1290 = vsub.f32 0.0, %v1280
        %v1291 = vsub.f32 0.0, %v1282
        %v1292 = vmul.f32 %v1284, 1.442695
        %v1293 = vpow.pop %v1292
        %v1294 = vmul.f32 %v1285, 1.442695
        %v1295 = vpow.pop %v1294
        %v1296 = vmul.f32 %v1286, 1.442695
        %v1297 = vpow.pop %v1296
        %v1298 = vmul.f32 %v1287, 1.442695
        %v1299 = vpow.pop %v1298
        %v1300 = vmul.f32 %v1288, 1.442695
        %v1301 = vpow.pop %v1300
        %v1302 = vmul.f32 %v1289, 1.442695
        %v1303 = vpow.pop %v1302
        %v1304 = vmul.f32 %v1290, 1.442695
        %v1305 = vpow.pop %v1304
        %v1306 = vmul.f32 %v1291, 1.442695
        %v1307 = vpow.pop %v1306
        %v1308 = vadd.f32 %v1293, 1.0
        %v1309 = vadd.f32 %v1295, 1.0
        %v1310 = vadd.f32 %v1297, 1.0
        %v1311 = vadd.f32 %v1299, 1.0
        %v1312 = vadd.f32 %v1301, 1.0
        %v1313 = vadd.f32 %v1303, 1.0
        %v1314 = vadd.f32 %v1305, 1.0
        %v1315 = vadd.f32 %v1307, 1.0
        %v1316 = vrcp.pop %v1308
        %v1317 = vrcp.pop %v1309
        %v1318 = vrcp.pop %v1310
        %v1319 = vrcp.pop %v1311
        %v1320 = vrcp.pop %v1312
        %v1321 = vrcp.pop %v1313
        %v1322 = vrcp.pop %v1314
        %v1323 = vrcp.pop %v1315
        %v1324 = vpack.c.bf16 %v1318, %v1316
        %v1325 = vpack.c.bf16 %v1319, %v1317
        %v1326 = vpack.c.bf16 %v1322, %v1320
        %v1327 = vpack.c.bf16 %v1323, %v1321
        %v1332 = vunpack.c.l.b16 %v1324
        %v1333 = vunpack.c.l.b16 %v1325
        %v1334 = vunpack.c.h.b16 %v1324
        %v1335 = vunpack.c.h.b16 %v1325
        %v1336 = vunpack.c.l.b16 %v1326
        %v1337 = vunpack.c.l.b16 %v1327
        %v1338 = vunpack.c.h.b16 %v1326
        %v1339 = vunpack.c.h.b16 %v1327
        %v1340 = vpack.c.b16 %v1333, %v1332
        %v1341 = vpack.c.b16 %v1335, %v1334
        %v1342 = vpack.c.b16 %v1337, %v1336
        %v1343 = vpack.c.b16 %v1339, %v1338
        %vm1348 = vcmask 1043456
        %vm1349 = vcmask 523268
        %vm1350 = vmor %vm1349, %vm1348
        %1351 = vst.msk [vmem:[%s272] sm:$0xff] %vm1350, %v1340
        %1352 = vst.msk [vmem:[%s272 + $0x8] sm:$0xff] %vm1350, %v1341
        %1353 = vst.msk [vmem:[%s272 + $0x10] sm:$0xff] %vm1350, %v1342
        %1354 = vst.msk [vmem:[%s272 + $0x18] sm:$0xff] %vm1350, %v1343
        %s1355 = sand.u32 %s181, 1
        %s1356 = scalar_lea.sflag [#allocation3], %s1355
        %s1357 = sand.u32 %s181, 1
        %s1358 = smul.addr %s1357, 32
        %s1359 = scalar_lea.vmem [#allocation2], %s1358
        // Predicated region
        $region49: #{netl2_forward.1} parent=47 // pred_check
          %p1360 = pneg %p191
        $region50: #{netl2_forward.1} parent=47 // pred_check_branch
          %1362 = sbr.rel (%p1360) target = $region52
        $region51: #{netl2_forward.1} parent=47 // pred_region
          %s1363 = smul.u32 4, %s21
          %s1365 = ssub.s32 512, 512
          %1366 = vsyncadd %s1356, %s1365
          %s1367 = smul.addr %s1363, 2
          %s1368 = smul.addr %s1367, 64
          %s1369 = scalar_lea.hbm %s7, %s1368
          %s1370 = sshll.u32 %s1359, 4
          %s1371 = int_to_ptr.vmem [resolvable:$true] %s1370
          %1376 = dma.vmem_to_hbm [thread:$0]  %s1371, 512, %s1369, %s1356, 128, 128, 8
        $region52: #{netl2_forward.1} parent=47 // pred_fallthru
          _
      $region48: #{netl2_forward.1} parent=5 // pred_fallthru
        _
      %p1377 = scmp.le.s32.totalorder 2, %s16
      // Predicated region
      $region53: #{netl2_forward.1} parent=5 // pred_check
        %p1378 = pneg %p1377
      $region54: #{netl2_forward.1} parent=5 // pred_check_branch
        %1380 = sbr.rel (%p1378) target = $region56
      $region55: #{netl2_forward.1} parent=5 // pred_region
        %s1381 = ssub.s32 %s16, 2
        // Predicated region
        $region57: #{netl2_forward.1} parent=55 // pred_check
          %p1382 = pneg %p197
        $region58: #{netl2_forward.1} parent=55 // pred_check_branch
          %1384 = sbr.rel (%p1382) target = $region60
        $region59: #{netl2_forward.1} parent=55 // pred_region
          %s1385 = sand.u32 %s182, 1
          %s1386 = scalar_lea.sflag [#allocation3], %s1385
          %s1387 = sand.u32 %s182, 1
          %s1388 = smul.addr %s1387, 32
          %s1389 = scalar_lea.vmem [#allocation2], %s1388
          %1390 = dma.done %s1386, 512
        $region60: #{netl2_forward.1} parent=55 // pred_fallthru
          _
      $region56: #{netl2_forward.1} parent=5 // pred_fallthru
        _
    $region6: #{netl2_forward.1} parent=1 // loop_footer
      %s20 = sadd.s32 1, %s16
    $region7: #{netl2_forward.1} parent=1 // loop_footer_branch
      %15 = sbr.rel target = $region3
    $region8: #{netl2_forward.1} parent=1 // loop_exit
      _
    %1391 = vsyncpa [#allocation3], 1
    %s1392 = scalar_lea.sflag [#allocation3], 1
    %1393 = vsyncpa %s1392, 1

</llo_original>
